<compile_context>
chip_gen: v6e
topology: v6e:2x2x1
jax: 0.10.0
libtpu: 0.0.40
codegen_flags: <defaults>
</compile_context>

<pallas_src>
import jax
import jax.numpy as jnp
from jax.experimental import pallas as pl
from jax.experimental.pallas import tpu as pltpu


def spec_embedding_kernel(x_ref, w_ref, posb_ref, o_ref):
    """One (batch, N-tile) grid step.

    x_ref:    (C_in, tile_n)   bf16  channels-major backbone feature tile
    w_ref:    (C_in, hidden)   bf16  1x1-conv weight, pre-transposed (resident)
    posb_ref: (tile_n, hidden) f32   position embeddings + conv bias (batch-shared)
    o_ref:    (tile_n, hidden)       output tile
    """
    # Transpose-A matmul on the MXU: contract C_in (lhs dim 0 <-> rhs dim 0).
    # This fuses the NCHW -> (tokens, channels) transpose into the kernel.
    y = jax.lax.dot_general(
        x_ref[...], w_ref[...],
        dimension_numbers=(((0,), (0,)), ((), ())),
        preferred_element_type=jnp.float32)           # (tile_n, hidden) f32
    o_ref[...] = (y + posb_ref[...]).astype(o_ref.dtype)


def spec_embedding(x_feat, w, b, pos, res_feat, *, tile_n=None):
    """Forward of SpecEmbedding (post-backbone).

    x_feat:   (B, C_in, H, W)  backbone feature map (NCHW)
    w:        (hidden, C_in)   patch_embeddings.weight (1x1 conv, squeezed)
    b:        (hidden,)        patch_embeddings.bias
    pos:      (1, N, hidden)   position_embeddings, N = H*W
    res_feat: passed through unchanged (backbone low-level feature)
    returns (embeddings (B, N, hidden), res_feat)
    """
    B, C_in, H, W = x_feat.shape
    hidden = w.shape[0]
    N = H * W
    assert pos.shape == (1, N, hidden)

    # Free contiguous view NCHW -> (B, C_in, N); bf16 cast halves HBM read
    # traffic of the dominant stream (a real backbone would emit bf16 already).
    x_bcn = x_feat.reshape(B, C_in, N).astype(jnp.bfloat16)
    w_t = jnp.transpose(w, (1, 0)).astype(jnp.bfloat16)           # (C_in, hidden)
    # Conv bias folded into the (constant) position embedding ONCE, kept at
    # (N, hidden): no batch broadcast in HBM; reused across the batch grid axis.
    pos_b = (pos[0] + b[None, :]).astype(jnp.float32)             # (N, hidden)

    # N-tile: whole N when small / not lane-aligned, otherwise a multiple of
    # 128 capped so double-buffered x/pos/out tiles stay well under the scoped
    # VMEM defaults (16 MiB v5e, 32 MiB v6e/v7x; 64 MiB physical on v7x).
    # Raise via pltpu.CompilerParams(vmem_limit_bytes=...) if going bigger.
    if tile_n is None:
        tile_n = N if (N % 128 != 0) else min(N, 2048)
    n_tiles = pl.cdiv(N, tile_n)

    cost = pl.CostEstimate(
        flops=2 * B * N * C_in * hidden,
        transcendentals=0,
        bytes_accessed=(x_bcn.size * 2 + w_t.size * 2
                        + pos_b.size * 4 + B * N * hidden * 4),
    )

    out = pl.pallas_call(
        spec_embedding_kernel,
        out_shape=jax.ShapeDtypeStruct((B, N, hidden), x_feat.dtype),
        grid=(B, n_tiles),
        in_specs=[
            # Feature tile: batch dim squeezed out, channels-major (no HBM transpose).
            pl.BlockSpec((None, C_in, tile_n), lambda bi, ni: (bi, 0, ni)),
            # Weight: same block every step -> resident in VMEM, fetched once.
            pl.BlockSpec((C_in, hidden), lambda bi, ni: (0, 0)),
            # pos + bias: block index independent of batch -> shared over batch.
            pl.BlockSpec((tile_n, hidden), lambda bi, ni: (ni, 0)),
        ],
        out_specs=pl.BlockSpec((None, tile_n, hidden), lambda bi, ni: (bi, ni, 0)),
        compiler_params=pltpu.CompilerParams(
            dimension_semantics=("parallel", "parallel")),
        cost_estimate=cost,
    )(x_bcn, w_t, pos_b)

    return out, res_feat


if __name__ == "__main__":
    # Small shapes consistent with the module:
    #   backbone = resnet18  -> in_channels = 256
    #   config.hidden_size   = 128
    #   config.image_size    = 128 -> N = (128//16)**2 = 64, feature map 8x8
    B, C_in, H, W = 2, 256, 8, 8
    hidden = 128
    N = H * W

    key = jax.random.PRNGKey(0)
    k_x, k_w, k_b, k_p, k_r = jax.random.split(key, 5)

    x_feat = jax.random.normal(k_x, (B, C_in, H, W), dtype=jnp.float32)
    w = jax.random.normal(k_w, (hidden, C_in), dtype=jnp.float32) * 0.02
    b = jax.random.normal(k_b, (hidden,), dtype=jnp.float32) * 0.02
    pos = jax.random.normal(k_p, (1, N, hidden), dtype=jnp.float32)
    # synthetic low-level backbone feature passed through (res_feat)
    res_feat = jax.random.normal(k_r, (B, 64, 32, 32), dtype=jnp.float32)

    embeddings, res_out = spec_embedding(x_feat, w, b, pos, res_feat)
    jax.block_until_ready(embeddings)
    jax.block_until_ready(res_out)

    # Reference with the same bf16 operand rounding + f32 accumulation, so the
    # only delta vs. the kernel is MXU accumulation order.
    x_bf = x_feat.astype(jnp.bfloat16).astype(jnp.float32)
    w_bf = w.astype(jnp.bfloat16).astype(jnp.float32)
    x_nc = jnp.transpose(x_bf.reshape(B, C_in, N), (0, 2, 1))
    ref = (jnp.einsum("bnc,hc->bnh", x_nc, w_bf,
                      precision=jax.lax.Precision.HIGHEST)
           + b.reshape(1, 1, hidden) + pos)

    assert embeddings.shape == (B, N, hidden)
    assert embeddings.dtype == x_feat.dtype
    assert jnp.allclose(embeddings, ref, atol=2e-3, rtol=2e-3)
    assert res_out.shape == res_feat.shape

    print("KERNEL_OK")
</pallas_src>

<mosaic_0001>
module attributes {stable_mosaic.version = 11 : i64} {
  func.func @spec_embedding_kernel(%arg0: i32, %arg1: i32, %arg2: memref<1x256x64xbf16, #tpu.memory_space<vmem>>, %arg3: memref<256x128xbf16, #tpu.memory_space<vmem>>, %arg4: memref<64x128xf32, #tpu.memory_space<vmem>>, %arg5: memref<1x64x128xf32, #tpu.memory_space<vmem>>) attributes {dimension_semantics = [#tpu.dimension_semantics<parallel>, #tpu.dimension_semantics<parallel>], iteration_bounds = array<i64: 2, 1>, scalar_prefetch = 0 : i64, scratch_operands = 0 : i64, tpu.core_type = #tpu.core_type<tc>, window_params = [{transform_indices = @transform_0, window_bounds = array<i64: 1, 256, 64>}, {pipeline_mode = #tpu.pipeline_mode<synchronous>, transform_indices = @transform_1, window_bounds = array<i64: 256, 128>}, {transform_indices = @transform_2, window_bounds = array<i64: 64, 128>}, {transform_indices = @transform_3, window_bounds = array<i64: 1, 64, 128>}]} {
    %c0 = arith.constant 0 : index
    %c0_0 = arith.constant 0 : index
    %c0_1 = arith.constant 0 : index
    %0 = vector.load %arg2[%c0, %c0_0, %c0_1] : memref<1x256x64xbf16, #tpu.memory_space<vmem>>, vector<1x256x64xbf16>
    %1 = vector.shape_cast %0 : vector<1x256x64xbf16> to vector<256x64xbf16>
    %c0_2 = arith.constant 0 : index
    %c0_3 = arith.constant 0 : index
    %2 = vector.load %arg3[%c0_2, %c0_3] : memref<256x128xbf16, #tpu.memory_space<vmem>>, vector<256x128xbf16>
    %cst = arith.constant dense<0.000000e+00> : vector<64x128xf32>
    %3 = tpu.matmul %1, %2, %cst {dimension_numbers = #tpu.dot_dimension_numbers<[0], [0], [1], [1], [0, 1, 1, 1], [], []>} : vector<256x64xbf16>, vector<256x128xbf16>, vector<64x128xf32> -> vector<64x128xf32>
    %c0_4 = arith.constant 0 : index
    %c0_5 = arith.constant 0 : index
    %4 = vector.load %arg4[%c0_4, %c0_5] : memref<64x128xf32, #tpu.memory_space<vmem>>, vector<64x128xf32>
    %5 = arith.addf %3, %4 : vector<64x128xf32>
    %c0_6 = arith.constant 0 : index
    %c0_7 = arith.constant 0 : index
    %c0_8 = arith.constant 0 : index
    %6 = vector.load %arg5[%c0_6, %c0_7, %c0_8] : memref<1x64x128xf32, #tpu.memory_space<vmem>>, vector<1x64x128xf32>
    %7 = vector.shape_cast %6 : vector<1x64x128xf32> to vector<64x128xf32>
    %8 = vector.shape_cast %5 : vector<64x128xf32> to vector<1x64x128xf32>
    tpu.vector_store %arg5[%c0_6, %c0_7, %c0_8], %8 {strides = array<i32>} : memref<1x64x128xf32, #tpu.memory_space<vmem>>, vector<1x64x128xf32>,
    return
  }
  func.func @transform_0(%arg0: i32, %arg1: i32) -> (i32, i32, i32) {
    %c0_i32 = arith.constant 0 : i32
    %c0_i32_0 = arith.constant 0 : i32
    return %arg0, %c0_i32, %arg1 : i32, i32, i32
  }
  func.func @transform_1(%arg0: i32, %arg1: i32) -> (i32, i32) {
    %c0_i32 = arith.constant 0 : i32
    %c0_i32_0 = arith.constant 0 : i32
    %c0_i32_1 = arith.constant 0 : i32
    return %c0_i32, %c0_i32_0 : i32, i32
  }
  func.func @transform_2(%arg0: i32, %arg1: i32) -> (i32, i32) {
    %c0_i32 = arith.constant 0 : i32
    %c0_i32_0 = arith.constant 0 : i32
    return %arg1, %c0_i32 : i32, i32
  }
  func.func @transform_3(%arg0: i32, %arg1: i32) -> (i32, i32, i32) {
    %c0_i32 = arith.constant 0 : i32
    %c0_i32_0 = arith.constant 0 : i32
    return %arg0, %arg1, %c0_i32 : i32, i32, i32
  }
}

</mosaic_0001>

<llo_original>
// kernel: tpu_custom_call.1
$region0: #{tpu_custom_call.1}
  #allocation0 [shape = 'u32[]', space=smem, size = 0x4, offset = 0x4, fixed_abs, tag = 'smem constant byte address 0x4 - core index']
  #allocation1 [shape = 'u32[144,128]{1,0:T(1,128)}', space=vmem, size = 0x12000, scoped, tag = 'internal scratch']
  %s0 = inlined_call_operand.vmem [shape: bf16[2,256,64], index: 0, kind: input, shape index: {}]
  %s1 = inlined_call_operand.vmem [shape: bf16[256,128], index: 1, kind: input, shape index: {}]
  %s2 = inlined_call_operand.vmem [shape: f32[64,128], index: 2, kind: input, shape index: {}]
  %s3 = inlined_call_operand.hbm [shape: f32[2,64,128], index: 3, kind: output, shape index: {}]
  %s4 = sld [smem:[#allocation0]]
  $region45: #{tpu_custom_call.1} parent=0
    _
  %s6 = ssub.s32 1, %s4
  %s7 = scalar_select 0, %s6, %s4
  $region1: #{tpu_custom_call.1} parent=0
    #allocation2 [shape = 'u8[65536]{0}', space=vmem, size = 0x10000, scoped, tag = 'output window, operand 0']
    #allocation3 [shape = 's32[2]{0}', space=sflag, size = 0x8, scoped, tag = 'scoped memory for tpu_custom_call.1']
    %8 = vsyncpa [#allocation3], 0
    %s9 = scalar_lea.sflag [#allocation3], 1
    %10 = vsyncpa %s9, 0
    loop: start=0, step=1, limit=4
    $region2: #{tpu_custom_call.1} parent=1 // loop_pre_header
      _
    $region3: #{tpu_custom_call.1} parent=1 // loop_header
      %s12 = sphi 0, %s16
      %p13 = scmp.ge.s32.totalorder %s12, 4
      %s19 = sphi 0, %s31
      %s20 = sphi 0, %s27
      %s21 = sphi 0, %s19
      %s22 = sphi 0, %s20
      %s23 = sphi 0, %s21
      %s24 = sphi 0, %s22
      %s36 = sphi 0, %s38
      %s39 = sphi 0, %s36
      %s40 = sphi 0, %s39
      %s56 = sphi 0, %s40
      %s60 = sphi 0, %s60
      %s62 = sphi 0, %s60
      %s63 = sphi 0, %s62
      %s77 = sphi 0, %s63
      %s83 = sphi 0, %s85
      %s86 = sphi 0, %s83
      %s87 = sphi 0, %s86
      %s103 = sphi 0, %s87
      %s111 = sphi 0, %s113
      %s114 = sphi 0, %s111
      %s115 = sphi 0, %s114
      %s131 = sphi 0, %s115
    $region4: #{tpu_custom_call.1} parent=1 // loop_header_branch
      %15 = sbr.rel (%p13) target = $region8
    $region5: #{tpu_custom_call.1} parent=1 // loop_body
      %s17 = ssub.s32 %s12, 1
      %s18 = ssub.s32 %s12, 2
      %s25 = sadd.s32 1, %s20
      %p26 = scmp.ge.s32.totalorder %s25, 1
      %s27 = scalar_select %p26, 0, %s25
      %s28 = sadd.s32 1, %s19
      %s29 = scalar_select %p26, %s28, %s19
      %p30 = scmp.ge.s32.totalorder %s29, 2
      %s31 = scalar_select %p30, 0, %s29
      %s32 = ssub.s32 %s19, %s31
      %s33 = ssub.s32 %s20, %s27
      %s34 = sor.u32 %s32, %s33
      %p35 = scmp.eq.s32.totalorder %s34, 0
      %s37 = sadd.s32 %s36, 1
      %s38 = scalar_select %p35, %s36, %s37
      %p41 = pneg %p35
      %p42 = scmp.eq.s32.totalorder %s12, 1
      %p43 = por %p41, %p42
      %p44 = scmp.ne.s32.totalorder %s36, %s39
      %p45 = scmp.eq.s32.totalorder %s12, 0
      %p46 = por %p44, %p45
      %p47 = scmp.ne.s32.totalorder %s36, %s39
      %p48 = scmp.eq.s32.totalorder %s17, 1
      %p49 = por %p47, %p48
      %p50 = scmp.ne.s32.totalorder %s39, %s40
      %p51 = scmp.eq.s32.totalorder %s17, 0
      %p52 = por %p50, %p51
      %p53 = scmp.ne.s32.totalorder %s39, %s40
      %p54 = scmp.eq.s32.totalorder %s18, 1
      %p55 = por %p53, %p54
      %p57 = scmp.ne.s32.totalorder %s40, %s56
      %p58 = scmp.eq.s32.totalorder %s18, 0
      %p59 = por %p57, %p58
      %s61 = sadd.s32 %s60, 1
      %p64 = scmp.eq.s32.totalorder %s12, 1
      %p65 = scmp.ne.s32.totalorder %s60, %s62
      %p66 = scmp.eq.s32.totalorder %s12, 0
      %p67 = por %p65, %p66
      %p68 = scmp.ne.s32.totalorder %s60, %s62
      %p69 = scmp.eq.s32.totalorder %s17, 1
      %p70 = por %p68, %p69
      %p71 = scmp.ne.s32.totalorder %s62, %s63
      %p72 = scmp.eq.s32.totalorder %s17, 0
      %p73 = por %p71, %p72
      %p74 = scmp.ne.s32.totalorder %s62, %s63
      %p75 = scmp.eq.s32.totalorder %s18, 1
      %p76 = por %p74, %p75
      %p78 = scmp.ne.s32.totalorder %s63, %s77
      %p79 = scmp.eq.s32.totalorder %s18, 0
      %p80 = por %p78, %p79
      %s81 = ssub.s32 %s20, %s27
      %p82 = scmp.eq.s32.totalorder %s81, 0
      %s84 = sadd.s32 %s83, 1
      %s85 = scalar_select %p82, %s83, %s84
      %p88 = pneg %p82
      %p89 = scmp.eq.s32.totalorder %s12, 1
      %p90 = por %p88, %p89
      %p91 = scmp.ne.s32.totalorder %s83, %s86
      %p92 = scmp.eq.s32.totalorder %s12, 0
      %p93 = por %p91, %p92
      %p94 = scmp.ne.s32.totalorder %s83, %s86
      %p95 = scmp.eq.s32.totalorder %s17, 1
      %p96 = por %p94, %p95
      %p97 = scmp.ne.s32.totalorder %s86, %s87
      %p98 = scmp.eq.s32.totalorder %s17, 0
      %p99 = por %p97, %p98
      %p100 = scmp.ne.s32.totalorder %s86, %s87
      %p101 = scmp.eq.s32.totalorder %s18, 1
      %p102 = por %p100, %p101
      %p104 = scmp.ne.s32.totalorder %s87, %s103
      %p105 = scmp.eq.s32.totalorder %s18, 0
      %p106 = por %p104, %p105
      %s107 = ssub.s32 %s19, %s31
      %s108 = ssub.s32 %s20, %s27
      %s109 = sor.u32 %s107, %s108
      %p110 = scmp.eq.s32.totalorder %s109, 0
      %s112 = sadd.s32 %s111, 1
      %s113 = scalar_select %p110, %s111, %s112
      %p116 = pneg %p110
      %p117 = scmp.eq.s32.totalorder %s12, 1
      %p118 = por %p116, %p117
      %p119 = scmp.ne.s32.totalorder %s111, %s114
      %p120 = scmp.eq.s32.totalorder %s12, 0
      %p121 = por %p119, %p120
      %p122 = scmp.ne.s32.totalorder %s111, %s114
      %p123 = scmp.eq.s32.totalorder %s17, 1
      %p124 = por %p122, %p123
      %p125 = scmp.ne.s32.totalorder %s114, %s115
      %p126 = scmp.eq.s32.totalorder %s17, 0
      %p127 = por %p125, %p126
      %p128 = scmp.ne.s32.totalorder %s114, %s115
      %p129 = scmp.eq.s32.totalorder %s18, 1
      %p130 = por %p128, %p129
      %p132 = scmp.ne.s32.totalorder %s115, %s131
      %p133 = scmp.eq.s32.totalorder %s18, 0
      %p134 = por %p132, %p133
      %p135 = scmp.le.s32.totalorder 1, %s12
      %p136 = scmp.lt.s32.totalorder %s12, 3
      %p137 = pnand %p135, %p136
      %p138 = pneg %p137
      // Predicated region
      $region9: #{tpu_custom_call.1} parent=5 // pred_check
        _
      $region10: #{tpu_custom_call.1} parent=5 // pred_check_branch
        %140 = sbr.rel (%p137) target = $region12
      $region11: #{tpu_custom_call.1} parent=5 // pred_region
        %s141 = ssub.s32 %s12, 1
        // Predicated region
        $region13: #{tpu_custom_call.1} parent=11 // pred_check
          %p142 = pneg %p73
        $region14: #{tpu_custom_call.1} parent=11 // pred_check_branch
          %144 = sbr.rel (%p142) target = $region16
        $region15: #{tpu_custom_call.1} parent=11 // pred_region
          _
        $region16: #{tpu_custom_call.1} parent=11 // pred_fallthru
          _
        // Predicated region
        $region17: #{tpu_custom_call.1} parent=11 // pred_check
          %p145 = pneg %p99
        $region18: #{tpu_custom_call.1} parent=11 // pred_check_branch
          %147 = sbr.rel (%p145) target = $region20
        $region19: #{tpu_custom_call.1} parent=11 // pred_region
          %s148 = smul.u32 8, %s22
          %p149 = scmp.lt.s32.totalorder %s148, 7
          %s150 = scalar_select %p149, %s148, 7
          %s151 = smul.addr %s150, 8
          %s152 = scalar_lea.vmem %s2, %s151
          %s153 = smul.u32 8, %s22
        $region20: #{tpu_custom_call.1} parent=11 // pred_fallthru
          _
      $region12: #{tpu_custom_call.1} parent=5 // pred_fallthru
        _
      %p154 = scmp.lt.s32.totalorder %s12, 2
      // Predicated region
      $region21: #{tpu_custom_call.1} parent=5 // pred_check
        %p155 = pneg %p154
      $region22: #{tpu_custom_call.1} parent=5 // pred_check_branch
        %157 = sbr.rel (%p155) target = $region24
      $region23: #{tpu_custom_call.1} parent=5 // pred_region
        // Predicated region
        $region25: #{tpu_custom_call.1} parent=23 // pred_check
          %p158 = pneg %p46
        $region26: #{tpu_custom_call.1} parent=23 // pred_check_branch
          %160 = sbr.rel (%p158) target = $region28
        $region27: #{tpu_custom_call.1} parent=23 // pred_region
          %p161 = scmp.lt.s32.totalorder %s19, 1
          %s162 = scalar_select %p161, %s19, 1
          %p163 = scmp.lt.s32.totalorder %s20, 0
          %s164 = scalar_select %p163, %s20, 0
          %s165 = smul.addr %s162, 32
          %s166 = sadd.s32 %s164, %s165
          %s167 = smul.addr %s166, 4
          %s168 = scalar_lea.vmem %s0, %s167
        $region28: #{tpu_custom_call.1} parent=23 // pred_fallthru
          _
      $region24: #{tpu_custom_call.1} parent=5 // pred_fallthru
        _
      %p169 = scmp.le.s32.totalorder 1, %s12
      %p170 = scmp.lt.s32.totalorder %s12, 3
      %p171 = pnand %p169, %p170
      %p172 = pneg %p171
      // Predicated region
      $region29: #{tpu_custom_call.1} parent=5 // pred_check
        _
      $region30: #{tpu_custom_call.1} parent=5 // pred_check_branch
        %174 = sbr.rel (%p171) target = $region32
      $region31: #{tpu_custom_call.1} parent=5 // pred_region
        %s175 = ssub.s32 %s12, 1
        %p176 = scmp.lt.s32.totalorder %s21, 1
        %s177 = scalar_select %p176, %s21, 1
        %p178 = scmp.lt.s32.totalorder %s22, 0
        %s179 = scalar_select %p178, %s22, 0
        %s180 = smul.addr %s177, 32
        %s181 = sadd.s32 %s179, %s180
        %s182 = smul.addr %s181, 4
        %s183 = scalar_lea.vmem %s0, %s182
        %p184 = pneg %p52
        %p185 = pneg %p49
        %p186 = pneg %p73
        %p187 = pneg %p70
        %s188 = smul.u32 8, %s22
        %p189 = scmp.lt.s32.totalorder %s188, 7
        %s190 = scalar_select %p189, %s188, 7
        %s191 = smul.addr %s190, 8
        %s192 = scalar_lea.vmem %s2, %s191
        %p193 = pneg %p99
        %p194 = pneg %p96
        %p195 = pneg %p127
        %p196 = pneg %p124
        %s197 = sand.u32 %s114, 1
        %s198 = scalar_lea.sflag [#allocation3], %s197
        %s199 = sand.u32 %s114, 1
        %s200 = smul.addr %s199, 64
        %s201 = scalar_lea.vmem [#allocation2], %s200
        %p202 = scmp.lt.s32.totalorder %s21, 1
        %s203 = scalar_select %p202, %s21, 1
        %p204 = scmp.lt.s32.totalorder %s22, 0
        %s205 = scalar_select %p204, %s22, 0
        %s206 = smul.addr %s203, 32
        %s207 = sadd.s32 %s205, %s206
        %s208 = smul.addr %s207, 4
        %s209 = scalar_lea.vmem %s0, %s208
        %s210 = smul.u32 8, %s22
        %p211 = scmp.lt.s32.totalorder %s210, 7
        %s212 = scalar_select %p211, %s210, 7
        %s213 = smul.addr %s212, 8
        %s214 = scalar_lea.vmem %s2, %s213
        %s215 = smul.u32 8, %s22
        %s216 = smul.u32 8, %s22
        %v218 = vld [vmem:[%s209] sm:$0xf]
        %v219 = vld [vmem:[%s209 + $0x4] sm:$0xf]
        %v220 = vld [vmem:[%s209 + $0x8] sm:$0xf]
        %v221 = vld [vmem:[%s209 + $0xc] sm:$0xf]
        %v222 = vld [vmem:[%s209 + $0x10] sm:$0xf]
        %v223 = vld [vmem:[%s209 + $0x14] sm:$0xf]
        %v224 = vld [vmem:[%s209 + $0x18] sm:$0xf]
        %v225 = vld [vmem:[%s209 + $0x1c] sm:$0xf]
        %v226 = vld [vmem:[%s209 + $0x20] sm:$0xf]
        %v227 = vld [vmem:[%s209 + $0x24] sm:$0xf]
        %v228 = vld [vmem:[%s209 + $0x28] sm:$0xf]
        %v229 = vld [vmem:[%s209 + $0x2c] sm:$0xf]
        %v230 = vld [vmem:[%s209 + $0x30] sm:$0xf]
        %v231 = vld [vmem:[%s209 + $0x34] sm:$0xf]
        %v232 = vld [vmem:[%s209 + $0x38] sm:$0xf]
        %v233 = vld [vmem:[%s209 + $0x3c] sm:$0xf]
        %v234 = vld [vmem:[%s209 + $0x40] sm:$0xf]
        %v235 = vld [vmem:[%s209 + $0x44] sm:$0xf]
        %v236 = vld [vmem:[%s209 + $0x48] sm:$0xf]
        %v237 = vld [vmem:[%s209 + $0x4c] sm:$0xf]
        %v238 = vld [vmem:[%s209 + $0x50] sm:$0xf]
        %v239 = vld [vmem:[%s209 + $0x54] sm:$0xf]
        %v240 = vld [vmem:[%s209 + $0x58] sm:$0xf]
        %v241 = vld [vmem:[%s209 + $0x5c] sm:$0xf]
        %v242 = vld [vmem:[%s209 + $0x60] sm:$0xf]
        %v243 = vld [vmem:[%s209 + $0x64] sm:$0xf]
        %v244 = vld [vmem:[%s209 + $0x68] sm:$0xf]
        %v245 = vld [vmem:[%s209 + $0x6c] sm:$0xf]
        %v246 = vld [vmem:[%s209 + $0x70] sm:$0xf]
        %v247 = vld [vmem:[%s209 + $0x74] sm:$0xf]
        %v248 = vld [vmem:[%s209 + $0x78] sm:$0xf]
        %v249 = vld [vmem:[%s209 + $0x7c] sm:$0xf]
        %v250 = vld [vmem:[%s1] sm:$0xf]
        %v251 = vld [vmem:[%s1 + $0x4] sm:$0xf]
        %v252 = vld [vmem:[%s1 + $0x8] sm:$0xf]
        %v253 = vld [vmem:[%s1 + $0xc] sm:$0xf]
        %v254 = vld [vmem:[%s1 + $0x10] sm:$0xf]
        %v255 = vld [vmem:[%s1 + $0x14] sm:$0xf]
        %v256 = vld [vmem:[%s1 + $0x18] sm:$0xf]
        %v257 = vld [vmem:[%s1 + $0x1c] sm:$0xf]
        %v258 = vld [vmem:[%s1 + $0x20] sm:$0xf]
        %v259 = vld [vmem:[%s1 + $0x24] sm:$0xf]
        %v260 = vld [vmem:[%s1 + $0x28] sm:$0xf]
        %v261 = vld [vmem:[%s1 + $0x2c] sm:$0xf]
        %v262 = vld [vmem:[%s1 + $0x30] sm:$0xf]
        %v263 = vld [vmem:[%s1 + $0x34] sm:$0xf]
        %v264 = vld [vmem:[%s1 + $0x38] sm:$0xf]
        %v265 = vld [vmem:[%s1 + $0x3c] sm:$0xf]
        %v266 = vld [vmem:[%s1 + $0x40] sm:$0xf]
        %v267 = vld [vmem:[%s1 + $0x44] sm:$0xf]
        %v268 = vld [vmem:[%s1 + $0x48] sm:$0xf]
        %v269 = vld [vmem:[%s1 + $0x4c] sm:$0xf]
        %v270 = vld [vmem:[%s1 + $0x50] sm:$0xf]
        %v271 = vld [vmem:[%s1 + $0x54] sm:$0xf]
        %v272 = vld [vmem:[%s1 + $0x58] sm:$0xf]
        %v273 = vld [vmem:[%s1 + $0x5c] sm:$0xf]
        %v274 = vld [vmem:[%s1 + $0x60] sm:$0xf]
        %v275 = vld [vmem:[%s1 + $0x64] sm:$0xf]
        %v276 = vld [vmem:[%s1 + $0x68] sm:$0xf]
        %v277 = vld [vmem:[%s1 + $0x6c] sm:$0xf]
        %v278 = vld [vmem:[%s1 + $0x70] sm:$0xf]
        %v279 = vld [vmem:[%s1 + $0x74] sm:$0xf]
        %v280 = vld [vmem:[%s1 + $0x78] sm:$0xf]
        %v281 = vld [vmem:[%s1 + $0x7c] sm:$0xf]
        %v282 = vld [vmem:[%s214] sm:$0xff]
        %v283 = vld [vmem:[%s214 + $0x8] sm:$0xff]
        %v284 = vld [vmem:[%s214 + $0x10] sm:$0xff]
        %v285 = vld [vmem:[%s214 + $0x18] sm:$0xff]
        %v286 = vld [vmem:[%s214 + $0x20] sm:$0xff]
        %v287 = vld [vmem:[%s214 + $0x28] sm:$0xff]
        %v288 = vld [vmem:[%s214 + $0x30] sm:$0xff]
        %v289 = vld [vmem:[%s214 + $0x38] sm:$0xff]
        %v322 = vunpack.c.l.b16 %v218
        %v323 = vunpack.c.l.b16 %v219
        %v324 = vunpack.c.l.b16 %v220
        %v325 = vunpack.c.l.b16 %v221
        %v326 = vunpack.c.l.b16 %v222
        %v327 = vunpack.c.l.b16 %v223
        %v328 = vunpack.c.l.b16 %v224
        %v329 = vunpack.c.l.b16 %v225
        %v330 = vunpack.c.l.b16 %v226
        %v331 = vunpack.c.l.b16 %v227
        %v332 = vunpack.c.l.b16 %v228
        %v333 = vunpack.c.l.b16 %v229
        %v334 = vunpack.c.l.b16 %v230
        %v335 = vunpack.c.l.b16 %v231
        %v336 = vunpack.c.l.b16 %v232
        %v337 = vunpack.c.l.b16 %v233
        %v338 = vunpack.c.l.b16 %v234
        %v339 = vunpack.c.l.b16 %v235
        %v340 = vunpack.c.l.b16 %v236
        %v341 = vunpack.c.l.b16 %v237
        %v342 = vunpack.c.l.b16 %v238
        %v343 = vunpack.c.l.b16 %v239
        %v344 = vunpack.c.l.b16 %v240
        %v345 = vunpack.c.l.b16 %v241
        %v346 = vunpack.c.l.b16 %v242
        %v347 = vunpack.c.l.b16 %v243
        %v348 = vunpack.c.l.b16 %v244
        %v349 = vunpack.c.l.b16 %v245
        %v350 = vunpack.c.l.b16 %v246
        %v351 = vunpack.c.l.b16 %v247
        %v352 = vunpack.c.l.b16 %v248
        %v353 = vunpack.c.l.b16 %v249
        %v354 = vpack.c.b16 %v323, %v322
        %v355 = vpack.c.b16 %v325, %v324
        %v356 = vpack.c.b16 %v327, %v326
        %v357 = vpack.c.b16 %v329, %v328
        %v358 = vpack.c.b16 %v331, %v330
        %v359 = vpack.c.b16 %v333, %v332
        %v360 = vpack.c.b16 %v335, %v334
        %v361 = vpack.c.b16 %v337, %v336
        %v362 = vpack.c.b16 %v339, %v338
        %v363 = vpack.c.b16 %v341, %v340
        %v364 = vpack.c.b16 %v343, %v342
        %v365 = vpack.c.b16 %v345, %v344
        %v366 = vpack.c.b16 %v347, %v346
        %v367 = vpack.c.b16 %v349, %v348
        %v368 = vpack.c.b16 %v351, %v350
        %v369 = vpack.c.b16 %v353, %v352
        %386 = vxpose.xlu0.c.b16.start [1/8] %v354, 128
        %387 = vxpose.xlu0.c.b16.cont [2/8] %v355, 128
        %388 = vxpose.xlu0.c.b16.cont [3/8] %v356, 128
        %389 = vxpose.xlu0.c.b16.cont [4/8] %v357, 128
        %390 = vxpose.xlu0.c.b16.cont [5/8] %v358, 128
        %391 = vxpose.xlu0.c.b16.cont [6/8] %v359, 128
        %392 = vxpose.xlu0.c.b16.cont [7/8] %v360, 128
        %393 = vxpose.xlu0.c.b16.end [8/8] %v361, 128
        %v394 = vpop.trf.xlu0
        %v395 = vpop.trf.xlu0
        %v396 = vpop.trf.xlu0
        %v397 = vpop.trf.xlu0
        %v398 = vpop.trf.xlu0
        %v399 = vpop.trf.xlu0
        %v400 = vpop.trf.xlu0
        %v401 = vpop.trf.xlu0
        %402 = vxpose.xlu0.c.b16.start [1/8] %v362, 128
        %403 = vxpose.xlu0.c.b16.cont [2/8] %v363, 128
        %404 = vxpose.xlu0.c.b16.cont [3/8] %v364, 128
        %405 = vxpose.xlu0.c.b16.cont [4/8] %v365, 128
        %406 = vxpose.xlu0.c.b16.cont [5/8] %v366, 128
        %407 = vxpose.xlu0.c.b16.cont [6/8] %v367, 128
        %408 = vxpose.xlu0.c.b16.cont [7/8] %v368, 128
        %409 = vxpose.xlu0.c.b16.end [8/8] %v369, 128
        %v410 = vpop.trf.xlu0
        %v411 = vpop.trf.xlu0
        %v412 = vpop.trf.xlu0
        %v413 = vpop.trf.xlu0
        %v414 = vpop.trf.xlu0
        %v415 = vpop.trf.xlu0
        %v416 = vpop.trf.xlu0
        %v417 = vpop.trf.xlu0
        %v450 = vunpack.c.l.b16 %v250
        %v451 = vunpack.c.l.b16 %v251
        %v452 = vunpack.c.l.b16 %v252
        %v453 = vunpack.c.l.b16 %v253
        %v454 = vunpack.c.l.b16 %v254
        %v455 = vunpack.c.l.b16 %v255
        %v456 = vunpack.c.l.b16 %v256
        %v457 = vunpack.c.l.b16 %v257
        %v458 = vunpack.c.l.b16 %v258
        %v459 = vunpack.c.l.b16 %v259
        %v460 = vunpack.c.l.b16 %v260
        %v461 = vunpack.c.l.b16 %v261
        %v462 = vunpack.c.l.b16 %v262
        %v463 = vunpack.c.l.b16 %v263
        %v464 = vunpack.c.l.b16 %v264
        %v465 = vunpack.c.l.b16 %v265
        %v466 = vunpack.c.l.b16 %v266
        %v467 = vunpack.c.l.b16 %v267
        %v468 = vunpack.c.l.b16 %v268
        %v469 = vunpack.c.l.b16 %v269
        %v470 = vunpack.c.l.b16 %v270
        %v471 = vunpack.c.l.b16 %v271
        %v472 = vunpack.c.l.b16 %v272
        %v473 = vunpack.c.l.b16 %v273
        %v474 = vunpack.c.l.b16 %v274
        %v475 = vunpack.c.l.b16 %v275
        %v476 = vunpack.c.l.b16 %v276
        %v477 = vunpack.c.l.b16 %v277
        %v478 = vunpack.c.l.b16 %v278
        %v479 = vunpack.c.l.b16 %v279
        %v480 = vunpack.c.l.b16 %v280
        %v481 = vunpack.c.l.b16 %v281
        %v482 = vpack.c.b16 %v451, %v450
        %v483 = vpack.c.b16 %v453, %v452
        %v484 = vpack.c.b16 %v455, %v454
        %v485 = vpack.c.b16 %v457, %v456
        %v486 = vpack.c.b16 %v459, %v458
        %v487 = vpack.c.b16 %v461, %v460
        %v488 = vpack.c.b16 %v463, %v462
        %v489 = vpack.c.b16 %v465, %v464
        %v490 = vpack.c.b16 %v467, %v466
        %v491 = vpack.c.b16 %v469, %v468
        %v492 = vpack.c.b16 %v471, %v470
        %v493 = vpack.c.b16 %v473, %v472
        %v494 = vpack.c.b16 %v475, %v474
        %v495 = vpack.c.b16 %v477, %v476
        %v496 = vpack.c.b16 %v479, %v478
        %v497 = vpack.c.b16 %v481, %v480
        %514 = vmatprep.subr.bf16.mxu0 0
        %515 = vmatpush1.bf16.msra.mxu0 %v489
        %516 = vmatprep.subr.bf16.mxu0 0
        %517 = vmatpush1.bf16.msra.mxu0 %v488
        %518 = vmatprep.subr.bf16.mxu0 0
        %519 = vmatpush1.bf16.msra.mxu0 %v487
        %520 = vmatprep.subr.bf16.mxu0 0
        %521 = vmatpush1.bf16.msra.mxu0 %v486
        %522 = vmatprep.subr.bf16.mxu0 0
        %523 = vmatpush1.bf16.msra.mxu0 %v485
        %524 = vmatprep.subr.bf16.mxu0 0
        %525 = vmatpush1.bf16.msra.mxu0 %v484
        %526 = vmatprep.subr.bf16.mxu0 0
        %527 = vmatpush1.bf16.msra.mxu0 %v483
        %528 = vmatprep.subr.bf16.mxu0 0
        %529 = vmatpush1.bf16.msra.mxu0 %v482
        %530 = vmatprep.subr.bf16.mxu0 0
        %531 = vmatpush2.bf16.msra.mxu0 %v497
        %532 = vmatprep.subr.bf16.mxu0 0
        %533 = vmatpush2.bf16.msra.mxu0 %v496
        %534 = vmatprep.subr.bf16.mxu0 0
        %535 = vmatpush2.bf16.msra.mxu0 %v495
        %536 = vmatprep.subr.bf16.mxu0 0
        %537 = vmatpush2.bf16.msra.mxu0 %v494
        %538 = vmatprep.subr.bf16.mxu0 0
        %539 = vmatpush2.bf16.msra.mxu0 %v493
        %540 = vmatprep.subr.bf16.mxu0 0
        %541 = vmatpush2.bf16.msra.mxu0 %v492
        %542 = vmatprep.subr.bf16.mxu0 0
        %543 = vmatpush2.bf16.msra.mxu0 %v491
        %544 = vmatprep.subr.bf16.mxu0 0
        %545 = vmatpush2.bf16.msra.mxu0 %v490
        %546 = vmatprep.mubr.bf16.mxu0 %v410
        %547 = vmatmul.mubr.bf16.gmra.mxu0 %v394
        %v548 = vpop.f32.mrf.mxu0
        %v549 = vadd.f32 %v282, %v548
        %v550 = vpop.f32.mrf.mxu0
        %v551 = vpop.f32.mrf.mxu0
        %v552 = vadd.f32 %v283, %v551
        %v553 = vpop.f32.mrf.mxu0
        %554 = vmatprep.mubr.bf16.mxu0 %v411
        %555 = vmatmul.mubr.bf16.gmra.mxu0 %v395
        %v556 = vpop.f32.mrf.mxu0
        %v557 = vadd.f32 %v284, %v556
        %v558 = vpop.f32.mrf.mxu0
        %v559 = vpop.f32.mrf.mxu0
        %v560 = vadd.f32 %v285, %v559
        %v561 = vpop.f32.mrf.mxu0
        %562 = vmatprep.mubr.bf16.mxu0 %v412
        %563 = vmatmul.mubr.bf16.gmra.mxu0 %v396
        %v564 = vpop.f32.mrf.mxu0
        %v565 = vadd.f32 %v286, %v564
        %v566 = vpop.f32.mrf.mxu0
        %v567 = vpop.f32.mrf.mxu0
        %v568 = vadd.f32 %v287, %v567
        %v569 = vpop.f32.mrf.mxu0
        %570 = vmatprep.mubr.bf16.mxu0 %v413
        %571 = vmatmul.mubr.bf16.gmra.mxu0 %v397
        %v572 = vpop.f32.mrf.mxu0
        %v573 = vadd.f32 %v288, %v572
        %v574 = vpop.f32.mrf.mxu0
        %v575 = vpop.f32.mrf.mxu0
        %v576 = vadd.f32 %v289, %v575
        %v577 = vpop.f32.mrf.mxu0
        %578 = vdwg.mxu0
        %579 = vst [vmem:[%s201] sm:$0xff] %v549
        %580 = vst [vmem:[%s201 + $0x8] sm:$0xff] %v552
        %581 = vst [vmem:[%s201 + $0x10] sm:$0xff] %v557
        %582 = vst [vmem:[%s201 + $0x18] sm:$0xff] %v560
        %583 = vst [vmem:[%s201 + $0x20] sm:$0xff] %v565
        %584 = vst [vmem:[%s201 + $0x28] sm:$0xff] %v568
        %585 = vst [vmem:[%s201 + $0x30] sm:$0xff] %v573
        %586 = vst [vmem:[%s201 + $0x38] sm:$0xff] %v576
        %s587 = sand.u32 %s114, 1
        %s588 = scalar_lea.sflag [#allocation3], %s587
        %s589 = sand.u32 %s114, 1
        %s590 = smul.addr %s589, 64
        %s591 = scalar_lea.vmem [#allocation2], %s590
        // Predicated region
        $region33: #{tpu_custom_call.1} parent=31 // pred_check
          %p592 = pneg %p124
        $region34: #{tpu_custom_call.1} parent=31 // pred_check_branch
          %594 = sbr.rel (%p592) target = $region36
        $region35: #{tpu_custom_call.1} parent=31 // pred_region
          %s595 = smul.u32 8, %s22
          %s597 = ssub.s32 1024, 1024
          %598 = vsyncadd %s588, %s597
          %s599 = smul.addr %s21, 8
          %s600 = sadd.s32 %s595, %s599
          %s601 = smul.addr %s600, 128
          %s602 = scalar_lea.hbm %s3, %s601
          %s603 = sshll.u32 %s591, 4
          %s604 = int_to_ptr.vmem [resolvable:$true] %s603
          %609 = dma.vmem_to_hbm [thread:$0]  %s604, 1024, %s602, %s588, 128, 128, 8
        $region36: #{tpu_custom_call.1} parent=31 // pred_fallthru
          _
      $region32: #{tpu_custom_call.1} parent=5 // pred_fallthru
        _
      %p610 = scmp.le.s32.totalorder 2, %s12
      // Predicated region
      $region37: #{tpu_custom_call.1} parent=5 // pred_check
        %p611 = pneg %p610
      $region38: #{tpu_custom_call.1} parent=5 // pred_check_branch
        %613 = sbr.rel (%p611) target = $region40
      $region39: #{tpu_custom_call.1} parent=5 // pred_region
        %s614 = ssub.s32 %s12, 2
        // Predicated region
        $region41: #{tpu_custom_call.1} parent=39 // pred_check
          %p615 = pneg %p130
        $region42: #{tpu_custom_call.1} parent=39 // pred_check_branch
          %617 = sbr.rel (%p615) target = $region44
        $region43: #{tpu_custom_call.1} parent=39 // pred_region
          %s618 = sand.u32 %s115, 1
          %s619 = scalar_lea.sflag [#allocation3], %s618
          %s620 = sand.u32 %s115, 1
          %s621 = smul.addr %s620, 64
          %s622 = scalar_lea.vmem [#allocation2], %s621
          %623 = dma.done %s619, 1024
        $region44: #{tpu_custom_call.1} parent=39 // pred_fallthru
          _
      $region40: #{tpu_custom_call.1} parent=5 // pred_fallthru
        _
    $region6: #{tpu_custom_call.1} parent=1 // loop_footer
      %s16 = sadd.s32 1, %s12
    $region7: #{tpu_custom_call.1} parent=1 // loop_footer_branch
      %11 = sbr.rel target = $region3
    $region8: #{tpu_custom_call.1} parent=1 // loop_exit
      _
    %624 = vsyncpa [#allocation3], 1
    %s625 = scalar_lea.sflag [#allocation3], 1
    %626 = vsyncpa %s625, 1

</llo_original>
